<compile_context>
chip_gen: v7x
topology: tpu7x:2x2x1
jax: 0.10.0
libtpu: 0.0.40
codegen_flags: <defaults>
</compile_context>

<pallas_src>
import numpy as np
import jax
import jax.numpy as jnp
from jax.experimental import pallas as pl
from jax.experimental.pallas import tpu as pltpu

# ----------------------------- synthetic config -----------------------------
N_STATES = 16                                   # len(nw_list_normal) (synthetic)
N_QUBIT = int(np.ceil(np.log2(N_STATES)))       # 4
N_BLOCKS = 4
SHOTS = 8192
GAMMA, BETA, ALPHA = 0.1, 0.8, 0.3
EASY_SCALE = 2.0 ** (N_QUBIT - 1)
N_CLASSES = 10
LANES = 128                                     # lane-dense output width


# ---------------- quantum circuit simulation (plain-JAX glue) ----------------
# TODO(synk): complex64 state-vector simulation and multinomial shot sampling have
# no Pallas equivalent (no complex dtype / categorical RNG); they run as plain
# jitted JAX feeding the Pallas head.
def _u3_matrix(theta, phi, lam):
    ct = jnp.cos(theta / 2.0)
    st = jnp.sin(theta / 2.0)
    return jnp.array(
        [[ct, -jnp.exp(1j * lam) * st],
         [jnp.exp(1j * phi) * st, jnp.exp(1j * (phi + lam)) * ct]],
        dtype=jnp.complex64,
    )


def _apply_1q(state, gate, wire, n_wires):
    st = jnp.moveaxis(state, wire, 0).reshape(2, -1)
    st = gate @ st
    st = st.reshape((2,) * n_wires)
    return jnp.moveaxis(st, 0, wire)


def _apply_ctrl_1q(state, gate, control, target, n_wires):
    rest = [w for w in range(n_wires) if w not in (control, target)]
    perm = [control, target] + rest
    st = jnp.transpose(state, perm).reshape(2, 2, -1)
    st = jnp.stack([st[0], gate @ st[1]], axis=0)       # apply only if ctrl==1
    st = st.reshape((2,) * n_wires)
    inv = list(np.argsort(perm))
    return jnp.transpose(st, inv)


def quantum_layer_probs(params):
    """n_blocks of (U3 on every wire) + (circular CU3); returns |amp|^2 truncated."""
    n = N_QUBIT
    state = jnp.zeros((2,) * n, dtype=jnp.complex64).at[(0,) * n].set(1.0 + 0.0j)
    for k in range(N_BLOCKS):
        for w in range(n):                               # Op1QAllLayer(U3)
            th, ph, lam = params["u3"][k, w]
            state = _apply_1q(state, _u3_matrix(th, ph, lam), w, n)
        for idx in range(n):                             # Op2QAllLayer(CU3, circular)
            c, t = idx, (idx + 1) % n
            th, ph, lam = params["cu3"][k, idx]
            state = _apply_ctrl_1q(state, _u3_matrix(th, ph, lam), c, t, n)
    probs = jnp.abs(state.reshape(-1)) ** 2
    probs = probs[:N_STATES]
    return probs / jnp.sum(probs)                        # robust if N_STATES != 2**n


def sample_measured_probs(key, probs):
    """torch.multinomial(shots) + bincount / shots  (stochastic; fixed JAX key)."""
    samples = jax.random.choice(key, N_STATES, shape=(SHOTS,), p=probs)
    counts = jnp.bincount(samples, length=N_STATES).astype(jnp.float32)
    return counts / SHOTS


# ------------------------------- Pallas kernel -------------------------------
def _lew_head_kernel(probs_ref, waug_ref, o_ref):
    # probs_ref: (N_STATES, 1)        measured probabilities (column, like reference)
    # waug_ref:  (N_STATES + 1, 128)  rows [0:N) = fc.weight^T lane-padded,
    #                                 row N     = fc.bias lane-padded
    # o_ref:     (1, 128)             lane-dense logit row (valid lanes [:N_CLASSES])
    p = probs_ref[...]
    t0 = BETA * jnp.tanh(GAMMA * EASY_SCALE * p)                 # >= 0 (p >= 0)
    # t0 ** ALPHA via EUP log/exp; single guard so 0 ** 0.3 -> 0 exactly (torch semantics)
    t = jnp.where(t0 > 0.0, jnp.exp(ALPHA * jnp.log(t0)), 0.0)
    t = t - jnp.mean(t)                                          # x - mean(x)
    # Batch-invariant row computed once.  1x16x10 is far too small for the MXU:
    # do it as a VPU multiply + XLU sublane reduce, bias folded in as the last row.
    o_ref[...] = (jnp.sum(t * waug_ref[:N_STATES, :], axis=0, keepdims=True)
                  + waug_ref[N_STATES:, :])


_head_call = pl.pallas_call(
    _lew_head_kernel,
    out_shape=jax.ShapeDtypeStruct((1, LANES), jnp.float32),
    in_specs=[pl.BlockSpec(memory_space=pltpu.MemorySpace.VMEM)] * 2,
    out_specs=pl.BlockSpec(memory_space=pltpu.MemorySpace.VMEM),
)


def pack_fc(fc_w, fc_b):
    """One-time preprocessing: fold fc.weight^T and fc.bias into a lane-dense block."""
    waug = jnp.zeros((N_STATES + 1, LANES), jnp.float32)
    waug = waug.at[:N_STATES, :N_CLASSES].set(jnp.transpose(fc_w).astype(jnp.float32))
    waug = waug.at[N_STATES, :N_CLASSES].set(fc_b.astype(jnp.float32))
    return waug


def lew_hybrid_forward(x, measured_probs, fc_waug):
    """x: NCHW. Only x.shape[0] is consumed, matching the reference forward."""
    batch = x.shape[0]
    probs_col = measured_probs.reshape(N_STATES, 1).astype(jnp.float32)
    row = _head_call(probs_col, fc_waug)                  # (1, 128) lane-dense
    # All batch rows are identical by construction in the reference; the expand()
    # is a free broadcast outside the kernel (batch never enters the kernel).
    return jnp.broadcast_to(row[:, :N_CLASSES], (batch, N_CLASSES))


@jax.jit
def full_forward(x, params, fc_waug, key):
    """End-to-end jitted pipeline: quantum sim -> shot sampling -> Pallas head."""
    probs = quantum_layer_probs(params)
    measured = sample_measured_probs(key, probs)
    return lew_hybrid_forward(x, measured, fc_waug)


# ------------------------------------ main -----------------------------------
if __name__ == "__main__":
    key = jax.random.PRNGKey(0)
    k_u3, k_cu3, k_w, k_b, k_x, k_samp = jax.random.split(key, 6)

    # Deterministic parameter init (shapes implied by the module __init__).
    params = {
        "u3": jax.random.uniform(k_u3, (N_BLOCKS, N_QUBIT, 3),
                                 minval=-np.pi, maxval=np.pi, dtype=jnp.float32),
        "cu3": jax.random.uniform(k_cu3, (N_BLOCKS, N_QUBIT, 3),
                                  minval=-np.pi, maxval=np.pi, dtype=jnp.float32),
    }
    bound = 1.0 / np.sqrt(N_STATES)                       # nn.Linear default init
    fc_w = jax.random.uniform(k_w, (N_CLASSES, N_STATES),
                              minval=-bound, maxval=bound, dtype=jnp.float32)
    fc_b = jax.random.uniform(k_b, (N_CLASSES,),
                              minval=-bound, maxval=bound, dtype=jnp.float32)
    fc_waug = pack_fc(fc_w, fc_b)                         # one-time packing

    # Small NCHW input (values unused by the reference forward, only batch dim).
    x = jax.random.normal(k_x, (2, 1, 16, 16), dtype=jnp.float32)

    out = full_forward(x, params, fc_waug, k_samp)
    out = jax.block_until_ready(out)
    assert out.shape == (2, N_CLASSES) and out.dtype == jnp.float32
    assert bool(jnp.all(jnp.isfinite(out)))
    print("KERNEL_OK")
</pallas_src>

<mosaic_0001>
module attributes {stable_mosaic.version = 11 : i64} {
  func.func private @main(%arg0: i32) attributes {dimension_semantics = [#tpu.dimension_semantics<core_parallel>], iteration_bounds = array<i64: 2>, tpu.core_type = #tpu.core_type<sc_scalar_subcore>, window_params = []} {
    return
  }
}

module attributes {stable_mosaic.version = 11 : i64} {
  func.func private @main(%arg0: i32) attributes {dimension_semantics = [#tpu.dimension_semantics<core_parallel>], iteration_bounds = array<i64: 2>, tpu.core_type = #tpu.core_type<sc_scalar_subcore>, window_params = []} {
    return
  }
}

module attributes {stable_mosaic.version = 11 : i64} {
  func.func @_lew_head_kernel(%arg0: memref<16x1xf32, #tpu.memory_space<vmem>>, %arg1: memref<17x128xf32, #tpu.memory_space<vmem>>, %arg2: memref<1x128xf32, #tpu.memory_space<vmem>>) attributes {dimension_semantics = [], scalar_prefetch = 0 : i64, scratch_operands = 0 : i64, tpu.core_type = #tpu.core_type<tc>} {
    %c0 = arith.constant 0 : index
    %c0_0 = arith.constant 0 : index
    %0 = vector.load %arg0[%c0, %c0_0] : memref<16x1xf32, #tpu.memory_space<vmem>>, vector<16x1xf32>
    %cst = arith.constant 8.000000e-01 : f32
    %1 = vector.broadcast %cst : f32 to vector<16x1xf32>
    %2 = arith.mulf %1, %0 : vector<16x1xf32>
    %3 = math.tanh %2 : vector<16x1xf32>
    %cst_1 = arith.constant 8.000000e-01 : f32
    %4 = vector.broadcast %cst_1 : f32 to vector<16x1xf32>
    %5 = arith.mulf %4, %3 : vector<16x1xf32>
    %cst_2 = arith.constant 0.000000e+00 : f32
    %6 = vector.broadcast %cst_2 : f32 to vector<16x1xf32>
    %7 = arith.cmpf ogt, %5, %6 : vector<16x1xf32>
    %8 = math.log %5 : vector<16x1xf32>
    %cst_3 = arith.constant 3.000000e-01 : f32
    %9 = vector.broadcast %cst_3 : f32 to vector<16x1xf32>
    %10 = arith.mulf %9, %8 : vector<16x1xf32>
    %11 = math.exp %10 : vector<16x1xf32>
    %cst_4 = arith.constant 0.000000e+00 : f32
    %12 = vector.broadcast %cst_4 : f32 to vector<16x1xf32>
    %13 = arith.select %7, %11, %12 : vector<16x1xi1>, vector<16x1xf32>
    %14 = vector.shape_cast %13 : vector<16x1xf32> to vector<1x16x1xf32>
    %cst_5 = arith.constant dense<0.000000e+00> : vector<1xf32>
    %15 = vector.multi_reduction <add>, %14, %cst_5 [1, 2] : vector<1x16x1xf32> to vector<1xf32>
    %16 = vector.shape_cast %15 : vector<1xf32> to vector<1x1x1xf32>
    %17 = vector.extract %16[0, 0, 0] : f32 from vector<1x1x1xf32>
    %cst_6 = arith.constant 1.600000e+01 : f32
    %18 = arith.divf %17, %cst_6 : f32
    %19 = vector.broadcast %18 : f32 to vector<16x1xf32>
    %20 = arith.subf %13, %19 : vector<16x1xf32>
    %c0_7 = arith.constant 0 : index
    %c0_8 = arith.constant 0 : index
    %21 = vector.load %arg1[%c0_7, %c0_8] : memref<17x128xf32, #tpu.memory_space<vmem>>, vector<16x128xf32>
    %22 = vector.broadcast %20 : vector<16x1xf32> to vector<16x128xf32>
    %23 = arith.mulf %22, %21 : vector<16x128xf32>
    %cst_9 = arith.constant dense<0.000000e+00> : vector<128xf32>
    %24 = vector.multi_reduction <add>, %23, %cst_9 [0] : vector<16x128xf32> to vector<128xf32>
    %25 = vector.shape_cast %24 : vector<128xf32> to vector<1x128xf32>
    %c16 = arith.constant 16 : index
    %c0_10 = arith.constant 0 : index
    %26 = vector.load %arg1[%c16, %c0_10] : memref<17x128xf32, #tpu.memory_space<vmem>>, vector<1x128xf32>
    %27 = arith.addf %25, %26 : vector<1x128xf32>
    %c0_11 = arith.constant 0 : index
    %c0_12 = arith.constant 0 : index
    %28 = vector.load %arg2[%c0_11, %c0_12] : memref<1x128xf32, #tpu.memory_space<vmem>>, vector<1x128xf32>
    tpu.vector_store %arg2[%c0_11, %c0_12], %27 {strides = array<i32>} : memref<1x128xf32, #tpu.memory_space<vmem>>, vector<1x128xf32>,
    return
  }
}

</mosaic_0001>

<llo_original>
// kernel: custom-call
$region0: #{custom-call}
  %s0 = inlined_call_operand.vmem [shape: u32[8192], index: 0, kind: output, shape index: {}]

// kernel: full_forward.1
$region0: #{full_forward.1}
  #allocation0 [shape = 'u32[]', space=smem, size = 0x4, offset = 0x4, fixed_abs, tag = 'smem constant byte address 0x4 - core index']
  #allocation1 [shape = 'u32[144,128]{1,0:T(1,128)}', space=vmem, size = 0x12000, scoped, tag = 'internal scratch']
  %s0 = inlined_call_operand.vmem [shape: f32[16,1], index: 0, kind: input, shape index: {}]
  %s1 = inlined_call_operand.vmem [shape: f32[17,128], index: 1, kind: input, shape index: {}]
  %s2 = inlined_call_operand.vmem [shape: f32[1,128], index: 2, kind: output, shape index: {}]
  %s3 = sld [smem:[#allocation0]]
  $region18: #{full_forward.1} parent=0
    _
  %s5 = ssub.s32 1, %s3
  %s6 = scalar_select 0, %s5, %s3
  // Predicated region
  $region2: #{full_forward.1} parent=0 // pred_check
    _
  $region3: #{full_forward.1} parent=0 // pred_check_branch
    %8 = sbr.rel (0) target = $region5
  $region4: #{full_forward.1} parent=0 // pred_region
    _
  $region5: #{full_forward.1} parent=0 // pred_fallthru
    _
  // Predicated region
  $region6: #{full_forward.1} parent=0 // pred_check
    _
  $region7: #{full_forward.1} parent=0 // pred_check_branch
    %10 = sbr.rel (0) target = $region9
  $region8: #{full_forward.1} parent=0 // pred_region
    _
  $region9: #{full_forward.1} parent=0 // pred_fallthru
    _
  %v11 = vld [vmem:[%s0] sm:$0xff]
  %v12 = vld [vmem:[%s0 + $0x8] sm:$0xff]
  %v13 = vmul.f32 %v11, 0.8
  %v14 = vmul.f32 %v12, 0.8
  %v15 = vtanh.pop %v13
  %v16 = vtanh.pop %v14
  %v17 = vmul.f32 %v15, 0.8
  %v18 = vmul.f32 %v16, 0.8
  %vm19 = vcmp.gt.f32.partialorder %v17, 0.0
  %vm20 = vcmp.gt.f32.partialorder %v18, 0.0
  %v21 = vlog2.pop %v17
  %v22 = vmul.f32 %v21, 0.6931472
  %v23 = vlog2.pop %v18
  %v24 = vmul.f32 %v23, 0.6931472
  %v25 = vmul.f32 %v22, 0.3
  %v26 = vmul.f32 %v24, 0.3
  %v27 = vmul.f32 %v25, 1.442695
  %v28 = vpow.pop %v27
  %v29 = vmul.f32 %v26, 1.442695
  %v30 = vpow.pop %v29
  %v31 = vsel %vm19, %v28, 0.0
  %v32 = vsel %vm20, %v30, 0.0
  %vm33 = vcmask 7168
  %v34 = vsel %vm33, %v31, 0.0
  %v35 = vsel %vm33, %v32, 0.0
  %v36 = vadd.f32 %v34, %v35
  %37 = vadd.xlane.f32.xlu0 %v36
  %v38 = vpop.xlane.xlu0 %37
  %v39 = vrot.slane %v38, 4
  %v40 = vadd.f32 %v38, %v39
  %v41 = vrot.slane %v40, 2
  %v42 = vadd.f32 %v40, %v41
  %v43 = vrot.slane %v42, 1
  %v44 = vadd.f32 %v42, %v43
  %s45 = vtos %v44
  %v46 = vrcp.pop 16.0
  %s47 = vtos %v46
  %s48 = smul.f32 %s45, %s47
  %v49 = vstv %s48
  %v50 = vsub.f32 %v31, %v49
  %v51 = vsub.f32 %v32, %v49
  %v52 = vld [vmem:[%s1] sm:$0xff]
  %v53 = vld [vmem:[%s1 + $0x8] sm:$0xff]
  %55 = vset.pattern.permute.xlu0 0
  %56 = vperm.xlu0 %55, %v50
  %v57 = vpop.permute.xlu0 %56
  %60 = vset.pattern.permute.xlu0 0
  %61 = vperm.xlu0 %60, %v51
  %v62 = vpop.permute.xlu0 %61
  %v64 = vmul.f32 %v57, %v52
  %v65 = vmul.f32 %v62, %v53
  %v66 = vadd.f32 %v64, %v65
  %v67 = vrot.slane %v66, 4
  %v68 = vadd.f32 %v66, %v67
  %v69 = vrot.slane %v68, 2
  %v70 = vadd.f32 %v68, %v69
  %v71 = vrot.slane %v70, 1
  %v72 = vadd.f32 %v70, %v71
  %v73 = vld [vmem:[%s1 + $0x10] sm:$0x1]
  %v74 = vadd.f32 %v72, %v73
  %75 = vst [vmem:[%s2] sm:$0x1] %v74
  // Predicated region
  $region10: #{full_forward.1} parent=0 // pred_check
    _
  $region11: #{full_forward.1} parent=0 // pred_check_branch
    %77 = sbr.rel (0) target = $region13
  $region12: #{full_forward.1} parent=0 // pred_region
    _
  $region13: #{full_forward.1} parent=0 // pred_fallthru
    _
  // Predicated region
  $region14: #{full_forward.1} parent=0 // pred_check
    _
  $region15: #{full_forward.1} parent=0 // pred_check_branch
    %79 = sbr.rel (0) target = $region17
  $region16: #{full_forward.1} parent=0 // pred_region
    _
  $region17: #{full_forward.1} parent=0 // pred_fallthru
    _

</llo_original>
